<compile_context>
chip_gen: v5e
topology: v5e:2x2
jax: 0.10.0
libtpu: 0.0.40
codegen_flags: <defaults>
</compile_context>

<pallas_src>
import functools
import math

import jax
import jax.numpy as jnp
from jax.experimental import pallas as pl
from jax.experimental.pallas import tpu as pltpu


def _round_up(x: int, m: int) -> int:
    return ((x + m - 1) // m) * m


def _vmem_budget_bytes() -> int:
    """Generation-aware VMEM cap: ~75% of physical VMEM (96 MiB v5e/v6e, 48 MiB v7x)."""
    cap = 64 * 1024 * 1024  # conservative fallback (v7x-sized)
    try:
        info = pltpu.get_tpu_info()
        cap = int(getattr(info, "vmem_capacity_bytes", cap))
    except Exception:
        pass
    return (cap * 3) // 4


def _vmem_need(tm: int, tn: int, tk: int, w_bytes: int,
               bf16_cast: bool, buffer_count: int = 2) -> int:
    """Rough VMEM working-set estimate for one grid step (incl. pipelining)."""
    need = buffer_count * (tm * tk * 4 + tk * tn * w_bytes + tn * 4)  # pipelined inputs
    need += 2 * tm * tn * 4   # double-buffered output tile
    need += tm * tn * 4       # f32 accumulator scratch
    if bf16_cast:
        need += tm * tk * 2   # materialized in-kernel bf16 copy of the x tile
    return need


def _nonneg_linear_kernel(x_ref, w_ref, b_ref, o_ref, acc_ref, *, compute_dtype):
    k = pl.program_id(2)

    @pl.when(k == 0)
    def _():
        acc_ref[...] = jnp.zeros_like(acc_ref)

    # relu / transpose / (optional) bf16 cast of W were applied once at
    # parameter-prep time, so the kernel body is a pure MXU-native
    # [tm,tk] x [tk,tn] contraction with f32 accumulation.
    x = x_ref[...].astype(compute_dtype)
    acc_ref[...] += jnp.dot(x, w_ref[...], preferred_element_type=jnp.float32)

    # Bias add + dtype cast exactly once, on the last K step.
    @pl.when(k == pl.num_programs(2) - 1)
    def _():
        o_ref[...] = (acc_ref[...] + b_ref[...]).astype(o_ref.dtype)


def prepare_params(weight, bias=None, *, use_bf16=False,
                   tn_pref=512, tk_pref=2048, tm_assumed=512, vmem_budget=None):
    """One-time weight/bias prep: relu + transpose to [in, out] + pad (+ bf16 cast)."""
    out_f, in_f = weight.shape
    budget = _vmem_budget_bytes() if vmem_budget is None else int(vmem_budget)
    w_bytes = 2 if use_bf16 else 4

    # Lane/MXU-aligned tiles: large preferred tiles when the dim is big enough,
    # otherwise a single tile covering the 128-padded dim.
    tn = tn_pref if out_f >= tn_pref else _round_up(out_f, 128)
    tk = tk_pref if in_f >= tk_pref else _round_up(in_f, 128)

    # Shrink (K first, then N, then the assumed batch tile) until the working
    # set fits the generation-aware VMEM budget.
    while _vmem_need(tm_assumed, tn, tk, w_bytes, use_bf16) > budget:
        if tk > 128 and tk >= tn:
            tk = max(128, tk // 2)
        elif tn > 128:
            tn = max(128, tn // 2)
        elif tm_assumed > 8:
            tm_assumed = max(8, tm_assumed // 2)
        else:
            break

    in_pad = _round_up(in_f, tk)
    out_pad = _round_up(out_f, tn)

    # relu is part of NonNegLinear.forward(); applying it here (once per set of
    # parameters) is semantically identical and removes per-step VPU work and
    # the in-kernel VMEM temp.  Zero padding is safe because relu(0) == 0.
    w = jnp.maximum(weight.astype(jnp.float32), 0.0).T          # [in_f, out_f]
    if (in_pad, out_pad) != (in_f, out_f):
        w = jnp.pad(w, ((0, in_pad - in_f), (0, out_pad - out_f)))
    if use_bf16:
        w = w.astype(jnp.bfloat16)   # halves weight HBM traffic; f32 accumulation in-kernel

    if bias is None:
        b = jnp.zeros((out_pad,), jnp.float32)                  # bias=False variant
    else:
        b = bias.astype(jnp.float32)
        if out_pad != out_f:
            b = jnp.pad(b, (0, out_pad - out_f))
    b2d = b.reshape(1, out_pad)

    return {
        "w": w, "b": b2d,
        "in_f": in_f, "out_f": out_f,
        "in_pad": in_pad, "out_pad": out_pad,
        "tn": tn, "tk": tk, "tm_max": tm_assumed,
        "use_bf16": use_bf16, "budget": budget,
    }


def nonneg_linear(x, params, *, buffer_count=2):
    """x: [B, in_features] (f32) -> [B, out_features] = x @ relu(W).T + b."""
    B, in_f = x.shape
    assert in_f == params["in_f"], "in_features mismatch with prepared params"

    tn, tk = params["tn"], params["tk"]
    in_pad, out_pad = params["in_pad"], params["out_pad"]
    use_bf16 = params["use_bf16"]
    w, b2d = params["w"], params["b"]
    w_bytes = 2 if use_bf16 else 4

    # ---- batch tile: x is f32 in HBM -> sublane multiple of 8; shrink the
    #      tile rather than grossly over-padding small/odd batches ----
    m_align = 8
    tm = min(params["tm_max"], _round_up(B, m_align))
    while tm > m_align and 2 * (_round_up(B, tm) - B) > tm:
        tm = max(m_align, tm // 2)

    grid_i = -(-B // tm)
    grid_j = out_pad // tn

    # ---- v7x megacore: guarantee >= 2 (i, j) tiles when the shape allows so
    #      both TensorCores get work.  Prefer splitting N (the extra x re-read
    #      is cheap for a classifier head); fall back to splitting the batch. ----
    if grid_i * grid_j == 1:
        if tn >= 256:
            tn //= 2
            grid_j = out_pad // tn
        elif tm >= 2 * m_align:
            tm = _round_up(tm // 2, m_align)
            grid_i = -(-B // tm)

    B_pad = grid_i * tm
    grid_k = in_pad // tk
    grid = (grid_i, grid_j, grid_k)

    # ---- pad x only when needed (skipped when already tile-aligned) ----
    if (B_pad, in_pad) != (B, in_f):
        x = jnp.pad(x, ((0, B_pad - B), (0, in_pad - in_f)))

    compute_dtype = jnp.bfloat16 if use_bf16 else x.dtype
    kernel = functools.partial(_nonneg_linear_kernel, compute_dtype=compute_dtype)

    need = _vmem_need(tm, tn, tk, w_bytes, use_bf16, buffer_count)
    vmem_limit = int(min(params["budget"], max(need + (8 << 20), 32 << 20)))

    # Bytes as the grid actually moves them: x once per out-tile, W once per
    # B-tile, output written once, bias once per B-tile.
    cost = pl.CostEstimate(
        flops=2 * B_pad * in_pad * out_pad,
        transcendentals=0,
        bytes_accessed=(grid_j * B_pad * in_pad * 4
                        + grid_i * out_pad * in_pad * w_bytes
                        + B_pad * out_pad * 4
                        + grid_i * out_pad * 4),
    )

    # Optional deeper buffering for exposed-DMA regimes (large in_features,
    # small B); default 2 keeps the standard double-buffered pipeline.
    if buffer_count != 2:
        pm = pl.Buffered(buffer_count)
        x_spec = pl.BlockSpec((tm, tk), lambda i, j, k: (i, k), pipeline_mode=pm)
        w_spec = pl.BlockSpec((tk, tn), lambda i, j, k: (k, j), pipeline_mode=pm)
    else:
        x_spec = pl.BlockSpec((tm, tk), lambda i, j, k: (i, k))
        w_spec = pl.BlockSpec((tk, tn), lambda i, j, k: (k, j))

    y_pad = pl.pallas_call(
        kernel,
        out_shape=jax.ShapeDtypeStruct((B_pad, out_pad), x.dtype),
        grid_spec=pltpu.PrefetchScalarGridSpec(
            num_scalar_prefetch=0,
            grid=grid,
            in_specs=[
                x_spec,                                           # x tile [tm, tk]
                w_spec,                                           # W tile [tk, tn] (pre-relu'd, [in,out])
                pl.BlockSpec((1, tn), lambda i, j, k: (0, j)),    # bias tile
            ],
            out_specs=pl.BlockSpec((tm, tn), lambda i, j, k: (i, j)),
            scratch_shapes=[pltpu.VMEM((tm, tn), jnp.float32)],
        ),
        compiler_params=pltpu.CompilerParams(
            dimension_semantics=("parallel", "parallel", "arbitrary"),
            vmem_limit_bytes=vmem_limit,
        ),
        cost_estimate=cost,
    )(x, w, b2d)

    # slice padding away
    return y_pad[:B, :params["out_f"]]


def init_params(key, in_features, out_features, dtype=jnp.float32):
    """Deterministic Kaiming-uniform init, matching nn.Linear / reset_parameters."""
    kw, kb = jax.random.split(key)
    # kaiming_uniform_(a=sqrt(5)) -> bound = sqrt(6 / ((1 + a^2) * fan_in)) = 1/sqrt(fan_in)
    fan_in = in_features
    w_bound = 1.0 / math.sqrt(fan_in)
    weight = jax.random.uniform(kw, (out_features, in_features),
                                minval=-w_bound, maxval=w_bound, dtype=dtype)
    b_bound = 1.0 / math.sqrt(fan_in)
    bias = jax.random.uniform(kb, (out_features,),
                              minval=-b_bound, maxval=b_bound, dtype=dtype)
    # present in the module but unused in forward()
    normalization_multiplier = jnp.ones((1,), dtype=dtype)
    return weight, bias, normalization_multiplier


if __name__ == "__main__":
    key = jax.random.PRNGKey(0)
    k_x, k_p = jax.random.split(key)

    # small shapes consistent with the module's forward: [batch, in_features]
    batch = 2
    in_features = 32
    out_features = 16

    x = jax.random.normal(k_x, (batch, in_features), dtype=jnp.float32)
    weight, bias, norm_mult = init_params(k_p, in_features, out_features)

    # reference forward in plain JAX
    y_ref = x @ jnp.maximum(weight, 0.0).T + bias

    # f32 path (default): bit-exact parity with the PyTorch reference.
    params_f32 = prepare_params(weight, bias, use_bf16=False)
    y = jax.block_until_ready(nonneg_linear(x, params_f32))
    assert y.shape == (batch, out_features)
    assert jnp.allclose(y, y_ref, atol=1e-5, rtol=1e-5), "f32 kernel mismatch vs reference"

    # bf16-MXU path (perf mode: bf16 operands, f32 accumulation) - looser tolerance.
    params_bf16 = prepare_params(weight, bias, use_bf16=True)
    y16 = jax.block_until_ready(nonneg_linear(x, params_bf16))
    assert jnp.allclose(y16, y_ref, atol=3e-2, rtol=3e-2), "bf16 kernel mismatch vs reference"

    print("KERNEL_OK")
</pallas_src>

<mosaic_0001>
module attributes {stable_mosaic.version = 11 : i64} {
  func.func @_nonneg_linear_kernel(%arg0: i32, %arg1: i32, %arg2: i32, %arg3: memref<8x128xf32, #tpu.memory_space<vmem>>, %arg4: memref<128x128xf32, #tpu.memory_space<vmem>>, %arg5: memref<1x128xf32, #tpu.memory_space<vmem>>, %arg6: memref<8x128xf32, #tpu.memory_space<vmem>>, %arg7: memref<8x128xf32, #tpu.memory_space<vmem>>) attributes {dimension_semantics = [#tpu.dimension_semantics<parallel>, #tpu.dimension_semantics<parallel>, #tpu.dimension_semantics<arbitrary>], iteration_bounds = array<i64: 1, 1, 1>, scalar_prefetch = 0 : i64, scratch_operands = 1 : i64, tpu.core_type = #tpu.core_type<tc>, window_params = [{transform_indices = @transform_0, window_bounds = array<i64: 8, 128>}, {transform_indices = @transform_1, window_bounds = array<i64: 128, 128>}, {transform_indices = @transform_2, window_bounds = array<i64: 1, 128>}, {transform_indices = @transform_3, window_bounds = array<i64: 8, 128>}]} {
    %c0_i32 = arith.constant 0 : i32
    %0 = arith.cmpi eq, %arg2, %c0_i32 : i32
    %1 = arith.extui %0 : i1 to i32
    %c0_i32_0 = arith.constant 0 : i32
    %2 = arith.cmpi ne, %1, %c0_i32_0 : i32
    scf.if %2 {
      %cst_10 = arith.constant 0.000000e+00 : f32
      %12 = vector.broadcast %cst_10 : f32 to vector<8x128xf32>
      %c0_11 = arith.constant 0 : index
      %c0_12 = arith.constant 0 : index
      %13 = vector.load %arg7[%c0_11, %c0_12] : memref<8x128xf32, #tpu.memory_space<vmem>>, vector<8x128xf32>
      tpu.vector_store %arg7[%c0_11, %c0_12], %12 {strides = array<i32>} : memref<8x128xf32, #tpu.memory_space<vmem>>, vector<8x128xf32>,
    } else {
    }
    %c0 = arith.constant 0 : index
    %c0_1 = arith.constant 0 : index
    %3 = vector.load %arg3[%c0, %c0_1] : memref<8x128xf32, #tpu.memory_space<vmem>>, vector<8x128xf32>
    %c0_2 = arith.constant 0 : index
    %c0_3 = arith.constant 0 : index
    %4 = vector.load %arg7[%c0_2, %c0_3] : memref<8x128xf32, #tpu.memory_space<vmem>>, vector<8x128xf32>
    %c0_4 = arith.constant 0 : index
    %c0_5 = arith.constant 0 : index
    %5 = vector.load %arg4[%c0_4, %c0_5] : memref<128x128xf32, #tpu.memory_space<vmem>>, vector<128x128xf32>
    %cst = arith.constant dense<0.000000e+00> : vector<8x128xf32>
    %6 = tpu.matmul %3, %5, %cst {dimension_numbers = #tpu.dot_dimension_numbers<[1], [0], [0], [1], [0, 0, 1, 1], [], []>} : vector<8x128xf32>, vector<128x128xf32>, vector<8x128xf32> -> vector<8x128xf32>
    %7 = arith.addf %4, %6 : vector<8x128xf32>
    %c0_6 = arith.constant 0 : index
    %c0_7 = arith.constant 0 : index
    %8 = vector.load %arg7[%c0_6, %c0_7] : memref<8x128xf32, #tpu.memory_space<vmem>>, vector<8x128xf32>
    tpu.vector_store %arg7[%c0_6, %c0_7], %7 {strides = array<i32>} : memref<8x128xf32, #tpu.memory_space<vmem>>, vector<8x128xf32>,
    %c0_i32_8 = arith.constant 0 : i32
    %9 = arith.cmpi eq, %arg2, %c0_i32_8 : i32
    %10 = arith.extui %9 : i1 to i32
    %c0_i32_9 = arith.constant 0 : i32
    %11 = arith.cmpi ne, %10, %c0_i32_9 : i32
    scf.if %11 {
      %c0_10 = arith.constant 0 : index
      %c0_11 = arith.constant 0 : index
      %12 = vector.load %arg7[%c0_10, %c0_11] : memref<8x128xf32, #tpu.memory_space<vmem>>, vector<8x128xf32>
      %c0_12 = arith.constant 0 : index
      %c0_13 = arith.constant 0 : index
      %13 = vector.load %arg5[%c0_12, %c0_13] : memref<1x128xf32, #tpu.memory_space<vmem>>, vector<1x128xf32>
      %14 = vector.broadcast %13 : vector<1x128xf32> to vector<8x128xf32>
      %15 = arith.addf %12, %14 : vector<8x128xf32>
      %c0_14 = arith.constant 0 : index
      %c0_15 = arith.constant 0 : index
      %16 = vector.load %arg6[%c0_14, %c0_15] : memref<8x128xf32, #tpu.memory_space<vmem>>, vector<8x128xf32>
      tpu.vector_store %arg6[%c0_14, %c0_15], %15 {strides = array<i32>} : memref<8x128xf32, #tpu.memory_space<vmem>>, vector<8x128xf32>,
    } else {
    }
    return
  }
  func.func @transform_0(%arg0: i32, %arg1: i32, %arg2: i32) -> (i32, i32) {
    %c0_i32 = arith.constant 0 : i32
    return %arg0, %arg2 : i32, i32
  }
  func.func @transform_1(%arg0: i32, %arg1: i32, %arg2: i32) -> (i32, i32) {
    %c0_i32 = arith.constant 0 : i32
    return %arg2, %arg1 : i32, i32
  }
  func.func @transform_2(%arg0: i32, %arg1: i32, %arg2: i32) -> (i32, i32) {
    %c0_i32 = arith.constant 0 : i32
    %c0_i32_0 = arith.constant 0 : i32
    return %c0_i32, %arg1 : i32, i32
  }
  func.func @transform_3(%arg0: i32, %arg1: i32, %arg2: i32) -> (i32, i32) {
    %c0_i32 = arith.constant 0 : i32
    return %arg0, %arg1 : i32, i32
  }
}

</mosaic_0001>

<llo_original>
// kernel: tpu_custom_call.1
$region0: #{tpu_custom_call.1}
  #allocation0 [shape = 'u32[]', space=smem, size = 0x4, offset = 0x4, fixed_abs, tag = 'smem constant byte address 0x4 - core index']
  #allocation1 [shape = 'u32[72,128]{1,0:T(1,128)}', space=vmem, size = 0x9000, scoped, tag = 'internal scratch']
  #allocation2 [shape = 'f32[8,128]{1,0:T(8,128)}', space=vmem, size = 0x1000, scoped, tag = 'scratch operand']
  %s0 = inlined_call_operand.hbm [shape: f32[8,128], index: 0, kind: input, shape index: {}]
  %s1 = inlined_call_operand.hbm [shape: f32[128,128], index: 1, kind: input, shape index: {}]
  %s2 = inlined_call_operand.vmem [shape: f32[1,128], index: 2, kind: input, shape index: {}]
  %s3 = inlined_call_operand.hbm [shape: f32[8,128], index: 3, kind: output, shape index: {}]
  %s4 = sld [smem:[#allocation0]]
  $region38: #{tpu_custom_call.1} parent=0
    _
  %s6 = ssub.s32 1, %s4
  %s7 = scalar_select 0, %s6, %s4
  $region1: #{tpu_custom_call.1} parent=0
    #allocation3 [shape = 'u8[4096]{0}', space=vmem, size = 0x1000, scoped, tag = 'input window, operand 0, single buffered']
    #allocation4 [shape = 's32[1]{0}', space=sflag, size = 0x4, scoped, tag = 'scoped memory for tpu_custom_call.1']
    #allocation5 [shape = 's32[1]{0}', space=sflag, size = 0x4, scoped, tag = 'scoped memory for tpu_custom_call.1']
    #allocation6 [shape = 'u8[65536]{0}', space=vmem, size = 0x10000, scoped, tag = 'input window, operand 1, single buffered']
    #allocation7 [shape = 's32[1]{0}', space=sflag, size = 0x4, scoped, tag = 'scoped memory for tpu_custom_call.1']
    #allocation8 [shape = 'u8[4096]{0}', space=vmem, size = 0x1000, scoped, tag = 'output window, operand 0, single buffered']
    %8 = vsyncpa [#allocation4], 0
    %9 = vsyncpa [#allocation7], 0
    %10 = vsyncpa [#allocation5], 0
    // Predicated region
    $region2: #{tpu_custom_call.1} parent=1 // pred_check
      _
    $region3: #{tpu_custom_call.1} parent=1 // pred_check_branch
      %12 = sbr.rel (0) target = $region5
    $region4: #{tpu_custom_call.1} parent=1 // pred_region
      %14 = vsyncadd [#allocation4], 0
      %s16 = sshll.u32 %s0, 4
      %s17 = int_to_ptr.hbm [resolvable:$true] %s16
      %s18 = sshll.u32 [#allocation3], 4
      %s19 = int_to_ptr.vmem [resolvable:$true] %s18
      %21 = dma.hbm_to_vmem [thread:$0]  %s17, 128, %s19, [#allocation4]
    $region5: #{tpu_custom_call.1} parent=1 // pred_fallthru
      _
    // Predicated region
    $region6: #{tpu_custom_call.1} parent=1 // pred_check
      _
    $region7: #{tpu_custom_call.1} parent=1 // pred_check_branch
      %23 = sbr.rel (0) target = $region9
    $region8: #{tpu_custom_call.1} parent=1 // pred_region
      %25 = vsyncadd [#allocation7], 0
      %s26 = sshll.u32 %s1, 4
      %s27 = int_to_ptr.hbm [resolvable:$true] %s26
      %s28 = sshll.u32 [#allocation6], 4
      %s29 = int_to_ptr.vmem [resolvable:$true] %s28
      %34 = dma.hbm_to_vmem [thread:$0]  %s27, 2048, %s29, [#allocation7], 128, 128, 8
    $region9: #{tpu_custom_call.1} parent=1 // pred_fallthru
      _
    // Predicated region
    $region10: #{tpu_custom_call.1} parent=1 // pred_check
      _
    $region11: #{tpu_custom_call.1} parent=1 // pred_check_branch
      %36 = sbr.rel (0) target = $region13
    $region12: #{tpu_custom_call.1} parent=1 // pred_region
      _
    $region13: #{tpu_custom_call.1} parent=1 // pred_fallthru
      _
    // Predicated region
    $region14: #{tpu_custom_call.1} parent=1 // pred_check
      _
    $region15: #{tpu_custom_call.1} parent=1 // pred_check_branch
      %38 = sbr.rel (0) target = $region17
    $region16: #{tpu_custom_call.1} parent=1 // pred_region
      %40 = dma.done [#allocation4], 128
    $region17: #{tpu_custom_call.1} parent=1 // pred_fallthru
      _
    // Predicated region
    $region18: #{tpu_custom_call.1} parent=1 // pred_check
      _
    $region19: #{tpu_custom_call.1} parent=1 // pred_check_branch
      %42 = sbr.rel (0) target = $region21
    $region20: #{tpu_custom_call.1} parent=1 // pred_region
      %44 = dma.done [#allocation7], 2048
    $region21: #{tpu_custom_call.1} parent=1 // pred_fallthru
      _
    %p45 = scmp.eq.s32.totalorder 0, 0
    // Predicated region
    $region22: #{tpu_custom_call.1} parent=1 // pred_check
      %p46 = pneg %p45
    $region23: #{tpu_custom_call.1} parent=1 // pred_check_branch
      %48 = sbr.rel (%p46) target = $region25
    $region24: #{tpu_custom_call.1} parent=1 // pred_region
      %49 = vst [vmem:[#allocation2] sm:$0xff] 0.0
    $region25: #{tpu_custom_call.1} parent=1 // pred_fallthru
      _
    %v50 = vld [vmem:[#allocation3] sm:$0xff]
    %v51 = vld [vmem:[#allocation2] sm:$0xff]
    %v52 = vld [vmem:[#allocation6] sm:$0xff]
    %v53 = vld [vmem:[#allocation6 + $0x8] sm:$0xff]
    %v54 = vld [vmem:[#allocation6 + $0x10] sm:$0xff]
    %v55 = vld [vmem:[#allocation6 + $0x18] sm:$0xff]
    %v56 = vld [vmem:[#allocation6 + $0x20] sm:$0xff]
    %v57 = vld [vmem:[#allocation6 + $0x28] sm:$0xff]
    %v58 = vld [vmem:[#allocation6 + $0x30] sm:$0xff]
    %v59 = vld [vmem:[#allocation6 + $0x38] sm:$0xff]
    %v60 = vld [vmem:[#allocation6 + $0x40] sm:$0xff]
    %v61 = vld [vmem:[#allocation6 + $0x48] sm:$0xff]
    %v62 = vld [vmem:[#allocation6 + $0x50] sm:$0xff]
    %v63 = vld [vmem:[#allocation6 + $0x58] sm:$0xff]
    %v64 = vld [vmem:[#allocation6 + $0x60] sm:$0xff]
    %v65 = vld [vmem:[#allocation6 + $0x68] sm:$0xff]
    %v66 = vld [vmem:[#allocation6 + $0x70] sm:$0xff]
    %v67 = vld [vmem:[#allocation6 + $0x78] sm:$0xff]
    %68 = vmatpush.msra.mxu0 %v67
    %69 = vmatpush.msra.mxu0 %v66
    %70 = vmatpush.msra.mxu0 %v65
    %71 = vmatpush.msra.mxu0 %v64
    %72 = vmatpush.msra.mxu0 %v63
    %73 = vmatpush.msra.mxu0 %v62
    %74 = vmatpush.msra.mxu0 %v61
    %75 = vmatpush.msra.mxu0 %v60
    %76 = vmatpush.msra.mxu0 %v59
    %77 = vmatpush.msra.mxu0 %v58
    %78 = vmatpush.msra.mxu0 %v57
    %79 = vmatpush.msra.mxu0 %v56
    %80 = vmatpush.msra.mxu0 %v55
    %81 = vmatpush.msra.mxu0 %v54
    %82 = vmatpush.msra.mxu0 %v53
    %83 = vmatpush.msra.mxu0 %v52
    %84 = vmatmul.f32.gmra.mxu0 %v50
    %v85 = vpop.f32.mrf.mxu0
    %v86 = vadd.f32 0.0, %v85
    %87 = vdwg.mxu0
    %v88 = vadd.f32 %v51, %v86
    %89 = vst [vmem:[#allocation2] sm:$0xff] %v88
    // Predicated region
    $region26: #{tpu_custom_call.1} parent=1 // pred_check
      %p90 = pneg %p45
    $region27: #{tpu_custom_call.1} parent=1 // pred_check_branch
      %92 = sbr.rel (%p90) target = $region29
    $region28: #{tpu_custom_call.1} parent=1 // pred_region
      %v93 = vld [vmem:[#allocation2] sm:$0xff]
      %v94 = vld [vmem:[%s2] sm:$0x1]
      %v96 = vperm.slane %v94, 0
      %v98 = vadd.f32 %v93, %v96
      %99 = vst [vmem:[#allocation8] sm:$0xff] %v98
    $region29: #{tpu_custom_call.1} parent=1 // pred_fallthru
      _
    // Predicated region
    $region30: #{tpu_custom_call.1} parent=1 // pred_check
      _
    $region31: #{tpu_custom_call.1} parent=1 // pred_check_branch
      %101 = sbr.rel (0) target = $region33
    $region32: #{tpu_custom_call.1} parent=1 // pred_region
      %103 = vsyncadd [#allocation5], 0
      %s105 = sshll.u32 [#allocation8], 4
      %s106 = int_to_ptr.vmem [resolvable:$true] %s105
      %s107 = sshll.u32 %s3, 4
      %s108 = int_to_ptr.hbm [resolvable:$true] %s107
      %110 = dma.vmem_to_hbm [thread:$0]  %s106, 128, %s108, [#allocation5]
    $region33: #{tpu_custom_call.1} parent=1 // pred_fallthru
      _
    // Predicated region
    $region34: #{tpu_custom_call.1} parent=1 // pred_check
      _
    $region35: #{tpu_custom_call.1} parent=1 // pred_check_branch
      %112 = sbr.rel (0) target = $region37
    $region36: #{tpu_custom_call.1} parent=1 // pred_region
      %114 = dma.done [#allocation5], 128
    $region37: #{tpu_custom_call.1} parent=1 // pred_fallthru
      _
    %115 = vsyncpa [#allocation4], 1
    %116 = vsyncpa [#allocation7], 1
    %117 = vsyncpa [#allocation5], 1

</llo_original>
